<compile_context>
chip_gen: v7x
topology: tpu7x:2x2x1
jax: 0.10.0
libtpu: 0.0.40
codegen_flags: <defaults>
</compile_context>

<pallas_src>
import functools

import jax
import jax.numpy as jnp
from jax import lax
from jax.experimental import pallas as pl
from jax.experimental.pallas import tpu as pltpu

_INV_SQRT2 = 0.7071067811865476
_LANES = 128


def _gelu_exact(v):
    # Exactly the PyTorch graph: (v*0.5) * (erf(v/sqrt(2)) + 1)
    return (v * 0.5) * (lax.erf(v * _INV_SQRT2) + 1.0)


def _conv1x1_gelu_sum_kernel(x_ref, w_ref, b_ref, out_ref, acc_ref, *,
                             n_batch, chunk):
    """Grid = (P, S): P parallel partial sums x S sequential row-block steps.

    x_ref   : VMEM (N*Cin, ROWS, 128) f32 -- row n*Cin+k is batch n, in-chan k
    w_ref   : SMEM (Cout, Cin) f32        -- 1x1 conv weights (scalar reads)
    b_ref   : SMEM (Cout,)     f32
    out_ref : SMEM (1, 1)      f32        -- partial sum for this parallel index
    acc_ref : VMEM (chunk,128) f32        -- resident accumulator across S steps
    """
    cout, cin = w_ref.shape
    rows = x_ref.shape[1]
    num_chunks = rows // chunk
    s = pl.program_id(1)

    @pl.when(s == 0)
    def _init():
        acc_ref[...] = jnp.zeros_like(acc_ref)

    # Hoist the 24 weight / 8 bias scalars out of all loops (sregs).
    w_sc = [[w_ref[c, k] for k in range(cin)] for c in range(cout)]
    b_sc = [b_ref[c] for c in range(cout)]

    def chunk_body(ci, acc):
        r0 = ci * chunk
        if not isinstance(r0, int):
            r0 = pl.multiple_of(r0, chunk)
        part = None
        for n in range(n_batch):
            # Cin lane/sublane-dense (chunk,128) slabs; reused by all Cout channels.
            xs = [x_ref[n * cin + k, pl.ds(r0, chunk), :] for k in range(cin)]
            vals = []
            for c in range(cout):
                # 1x1 conv for (batch n, out-channel c): Cin scalar-broadcast FMAs.
                v = xs[0] * w_sc[c][0]
                for k in range(1, cin):
                    v = v + xs[k] * w_sc[c][k]
                vals.append(_gelu_exact(v + b_sc[c]))
            # Pairwise (tree) accumulation keeps the VALU dependency chain short.
            while len(vals) > 1:
                nxt = [vals[i] + vals[i + 1] for i in range(0, len(vals) - 1, 2)]
                if len(vals) % 2:
                    nxt.append(vals[-1])
                vals = nxt
            part = vals[0] if part is None else part + vals[0]
        return acc + part

    acc0 = jnp.zeros((chunk, _LANES), jnp.float32)
    if num_chunks == 1:
        step_acc = chunk_body(0, acc0)
    else:
        step_acc = lax.fori_loop(0, num_chunks, chunk_body, acc0,
                                 unroll=min(num_chunks, 4))
    acc_ref[...] += step_acc

    # torch.split + torch.cat over channels is a permutation -> the global sum is
    # unchanged, so one reduce at the very end is enough (no per-step XLU/scalar
    # serialization).
    @pl.when(s == pl.num_programs(1) - 1)
    def _finalize():
        out_ref[0, 0] = jnp.sum(acc_ref[...])


def _plan_tiling(rows_total, bytes_per_row, max_block_bytes=2 << 20):
    """Pick (P, S, ROWS) with P * S * ROWS == rows_total.

    P    : leading 'parallel' grid axis (2 -> both v7x TensorCores get work).
    S    : sequential reduction steps per parallel index ('arbitrary' axis).
    ROWS : sublane row-blocks per grid step; multiple of 8 whenever tiled.
    """
    P = 2 if (rows_total % 16 == 0) else 1
    per_p = rows_total // P
    max_rows = max(8, min(2048, (max_block_bytes // bytes_per_row) // 8 * 8))
    if per_p <= max_rows:
        return P, 1, per_p
    r = max_rows
    while r >= 8:
        if per_p % r == 0:
            return P, per_p // r, r
        r -= 8
    # TODO(synk): no multiple-of-8 divisor of per_p fits the budget; fall back to
    # one (possibly large) block per parallel index.
    return P, 1, per_p


def _pick_chunk(rows):
    # Rows per register-resident inner-loop iteration (1-2 vregs per value).
    for c in (16, 8):
        if rows >= c and rows % c == 0:
            return c
    return rows


def model_forward(x, weight, bias):
    """x: (N, Cin, H, W) NCHW like PyTorch; weight: (Cout, Cin, 1, 1); bias: (Cout,)."""
    N, Cin, H, W = x.shape
    Cout = weight.shape[0]
    HW = H * W

    # Free reshape of contiguous NCHW: spatial becomes the lane/sublane axes.
    x2d = x.reshape(N * Cin, HW).astype(jnp.float32)

    # Pad the pixel axis to a lane multiple with zeros; a zero pixel's conv output
    # is exactly `bias`, so its GELU contribution is removed analytically below
    # (together with adding the padding=1 border ring, which is never computed).
    HW_pad = ((HW + _LANES - 1) // _LANES) * _LANES
    n_pad = HW_pad - HW
    if n_pad:
        x2d = jnp.pad(x2d, ((0, 0), (0, n_pad)))

    rows_total = HW_pad // _LANES
    x3d = x2d.reshape(N * Cin, rows_total, _LANES)

    w_mat = weight.reshape(Cout, Cin).astype(jnp.float32)
    b_vec = bias.astype(jnp.float32)

    P, S, ROWS = _plan_tiling(rows_total, bytes_per_row=N * Cin * _LANES * 4)
    chunk = _pick_chunk(ROWS)

    kernel = functools.partial(_conv1x1_gelu_sum_kernel, n_batch=N, chunk=chunk)

    partials = pl.pallas_call(
        kernel,
        out_shape=jax.ShapeDtypeStruct((P, 1), jnp.float32),
        grid=(P, S),
        in_specs=[
            pl.BlockSpec((N * Cin, ROWS, _LANES),
                         lambda p, s: (0, p * S + s, 0)),   # lane+sublane dense
            pl.BlockSpec(memory_space=pltpu.SMEM),           # weights (scalars)
            pl.BlockSpec(memory_space=pltpu.SMEM),           # bias (scalars)
        ],
        out_specs=pl.BlockSpec((1, 1), lambda p, s: (p, 0),
                               memory_space=pltpu.SMEM),
        scratch_shapes=[pltpu.VMEM((chunk, _LANES), jnp.float32)],
        compiler_params=pltpu.CompilerParams(
            # Axis 0: independent partial sums (shardable across v7x's 2 TCs).
            # Axis 1: the pixel reduction with a resident accumulator.
            dimension_semantics=("parallel", "arbitrary"),
        ),
    )(x3d, w_mat, b_vec)

    # Analytic correction (host side):
    #   + padding=1 border ring: each of the N*n_border pixels contributes
    #     sum_c GELU(bias_c) (conv of zeros is just the bias),
    #   - lane-padding pixels the kernel DID compute (same per-pixel value).
    n_border = (H + 2) * (W + 2) - HW
    gelu_bias_sum = jnp.sum(_gelu_exact(b_vec))
    correction = jnp.float32(N * (n_border - n_pad)) * gelu_bias_sum

    return jnp.sum(partials) + correction


def _reference(x, weight, bias):
    # Pure-JAX reference of the original module (explicit pad + matmul path).
    N, Cin, H, W = x.shape
    Cout = weight.shape[0]
    xp = jnp.pad(x, ((0, 0), (0, 0), (1, 1), (1, 1)))
    xf = xp.transpose(0, 2, 3, 1).reshape(-1, Cin)
    v1 = xf @ weight.reshape(Cout, Cin).T + bias[None, :]
    v6 = 0.5 * v1 * (lax.erf(v1 * _INV_SQRT2) + 1.0)
    return jnp.sum(v6)


if __name__ == "__main__":
    key = jax.random.PRNGKey(0)
    kx, kw, kb, kx2 = jax.random.split(key, 4)

    Cin, Cout = 3, 8  # fixed by Conv2d(3, 8, 1)

    # Deterministic synthetic conv parameters.
    weight = 0.2 * jax.random.normal(kw, (Cout, Cin, 1, 1), dtype=jnp.float32)
    bias = 0.1 * jax.random.normal(kb, (Cout,), dtype=jnp.float32)

    # Small shape: rows_total = 2 -> single block, P = 1 path.
    x_small = jax.random.normal(kx, (2, Cin, 16, 16), dtype=jnp.float32)
    out_small = jax.block_until_ready(model_forward(x_small, weight, bias))
    ref_small = _reference(x_small, weight, bias)
    assert jnp.allclose(out_small, ref_small, rtol=1e-3, atol=1e-2), (out_small, ref_small)

    # The spec's shape (1, 3, 64, 64): rows_total = 32 -> P = 2 parallel partials.
    x_spec = jax.random.normal(kx2, (1, Cin, 64, 64), dtype=jnp.float32)
    out_spec = jax.block_until_ready(model_forward(x_spec, weight, bias))
    ref_spec = _reference(x_spec, weight, bias)
    assert jnp.allclose(out_spec, ref_spec, rtol=1e-3, atol=1e-2), (out_spec, ref_spec)

    print("KERNEL_OK")
</pallas_src>

<mosaic_0001>
module attributes {stable_mosaic.version = 11 : i64} {
  func.func @_conv1x1_gelu_sum_kernel(%arg0: i32, %arg1: i32, %arg2: memref<6x2x128xf32, #tpu.memory_space<vmem>>, %arg3: memref<8x3xf32, #tpu.memory_space<smem>>, %arg4: memref<8xf32, #tpu.memory_space<smem>>, %arg5: memref<1x1xf32, #tpu.memory_space<smem>>, %arg6: memref<2x128xf32, #tpu.memory_space<vmem>>) attributes {dimension_semantics = [#tpu.dimension_semantics<parallel>, #tpu.dimension_semantics<arbitrary>], iteration_bounds = array<i64: 1, 1>, scalar_prefetch = 0 : i64, scratch_operands = 1 : i64, tpu.core_type = #tpu.core_type<tc>, window_params = [{transform_indices = @transform_0, window_bounds = array<i64: 6, 2, 128>}, {transform_indices = @transform_1, window_bounds = array<i64: 8, 3>}, {transform_indices = @transform_2, window_bounds = array<i64: 8>}, {transform_indices = @transform_3, window_bounds = array<i64: 1, 1>}]} {
    %c0_i32 = arith.constant 0 : i32
    %0 = arith.cmpi eq, %arg1, %c0_i32 : i32
    %1 = arith.extui %0 : i1 to i32
    %c0_i32_0 = arith.constant 0 : i32
    %2 = arith.cmpi ne, %1, %c0_i32_0 : i32
    scf.if %2 {
      %cst_121 = arith.constant 0.000000e+00 : f32
      %358 = vector.broadcast %cst_121 : f32 to vector<2x128xf32>
      %c0_122 = arith.constant 0 : index
      %c0_123 = arith.constant 0 : index
      %359 = vector.load %arg6[%c0_122, %c0_123] : memref<2x128xf32, #tpu.memory_space<vmem>>, vector<2x128xf32>
      tpu.vector_store %arg6[%c0_122, %c0_123], %358 {strides = array<i32>} : memref<2x128xf32, #tpu.memory_space<vmem>>, vector<2x128xf32>,
    } else {
    }
    %c0 = arith.constant 0 : index
    %c0_1 = arith.constant 0 : index
    %3 = memref.load %arg3[%c0, %c0_1] : memref<8x3xf32, #tpu.memory_space<smem>>
    %c0_2 = arith.constant 0 : index
    %c1 = arith.constant 1 : index
    %4 = memref.load %arg3[%c0_2, %c1] : memref<8x3xf32, #tpu.memory_space<smem>>
    %c0_3 = arith.constant 0 : index
    %c2 = arith.constant 2 : index
    %5 = memref.load %arg3[%c0_3, %c2] : memref<8x3xf32, #tpu.memory_space<smem>>
    %c1_4 = arith.constant 1 : index
    %c0_5 = arith.constant 0 : index
    %6 = memref.load %arg3[%c1_4, %c0_5] : memref<8x3xf32, #tpu.memory_space<smem>>
    %c1_6 = arith.constant 1 : index
    %c1_7 = arith.constant 1 : index
    %7 = memref.load %arg3[%c1_6, %c1_7] : memref<8x3xf32, #tpu.memory_space<smem>>
    %c1_8 = arith.constant 1 : index
    %c2_9 = arith.constant 2 : index
    %8 = memref.load %arg3[%c1_8, %c2_9] : memref<8x3xf32, #tpu.memory_space<smem>>
    %c2_10 = arith.constant 2 : index
    %c0_11 = arith.constant 0 : index
    %9 = memref.load %arg3[%c2_10, %c0_11] : memref<8x3xf32, #tpu.memory_space<smem>>
    %c2_12 = arith.constant 2 : index
    %c1_13 = arith.constant 1 : index
    %10 = memref.load %arg3[%c2_12, %c1_13] : memref<8x3xf32, #tpu.memory_space<smem>>
    %c2_14 = arith.constant 2 : index
    %c2_15 = arith.constant 2 : index
    %11 = memref.load %arg3[%c2_14, %c2_15] : memref<8x3xf32, #tpu.memory_space<smem>>
    %c3 = arith.constant 3 : index
    %c0_16 = arith.constant 0 : index
    %12 = memref.load %arg3[%c3, %c0_16] : memref<8x3xf32, #tpu.memory_space<smem>>
    %c3_17 = arith.constant 3 : index
    %c1_18 = arith.constant 1 : index
    %13 = memref.load %arg3[%c3_17, %c1_18] : memref<8x3xf32, #tpu.memory_space<smem>>
    %c3_19 = arith.constant 3 : index
    %c2_20 = arith.constant 2 : index
    %14 = memref.load %arg3[%c3_19, %c2_20] : memref<8x3xf32, #tpu.memory_space<smem>>
    %c4 = arith.constant 4 : index
    %c0_21 = arith.constant 0 : index
    %15 = memref.load %arg3[%c4, %c0_21] : memref<8x3xf32, #tpu.memory_space<smem>>
    %c4_22 = arith.constant 4 : index
    %c1_23 = arith.constant 1 : index
    %16 = memref.load %arg3[%c4_22, %c1_23] : memref<8x3xf32, #tpu.memory_space<smem>>
    %c4_24 = arith.constant 4 : index
    %c2_25 = arith.constant 2 : index
    %17 = memref.load %arg3[%c4_24, %c2_25] : memref<8x3xf32, #tpu.memory_space<smem>>
    %c5 = arith.constant 5 : index
    %c0_26 = arith.constant 0 : index
    %18 = memref.load %arg3[%c5, %c0_26] : memref<8x3xf32, #tpu.memory_space<smem>>
    %c5_27 = arith.constant 5 : index
    %c1_28 = arith.constant 1 : index
    %19 = memref.load %arg3[%c5_27, %c1_28] : memref<8x3xf32, #tpu.memory_space<smem>>
    %c5_29 = arith.constant 5 : index
    %c2_30 = arith.constant 2 : index
    %20 = memref.load %arg3[%c5_29, %c2_30] : memref<8x3xf32, #tpu.memory_space<smem>>
    %c6 = arith.constant 6 : index
    %c0_31 = arith.constant 0 : index
    %21 = memref.load %arg3[%c6, %c0_31] : memref<8x3xf32, #tpu.memory_space<smem>>
    %c6_32 = arith.constant 6 : index
    %c1_33 = arith.constant 1 : index
    %22 = memref.load %arg3[%c6_32, %c1_33] : memref<8x3xf32, #tpu.memory_space<smem>>
    %c6_34 = arith.constant 6 : index
    %c2_35 = arith.constant 2 : index
    %23 = memref.load %arg3[%c6_34, %c2_35] : memref<8x3xf32, #tpu.memory_space<smem>>
    %c7 = arith.constant 7 : index
    %c0_36 = arith.constant 0 : index
    %24 = memref.load %arg3[%c7, %c0_36] : memref<8x3xf32, #tpu.memory_space<smem>>
    %c7_37 = arith.constant 7 : index
    %c1_38 = arith.constant 1 : index
    %25 = memref.load %arg3[%c7_37, %c1_38] : memref<8x3xf32, #tpu.memory_space<smem>>
    %c7_39 = arith.constant 7 : index
    %c2_40 = arith.constant 2 : index
    %26 = memref.load %arg3[%c7_39, %c2_40] : memref<8x3xf32, #tpu.memory_space<smem>>
    %c0_41 = arith.constant 0 : index
    %27 = memref.load %arg4[%c0_41] : memref<8xf32, #tpu.memory_space<smem>>
    %c1_42 = arith.constant 1 : index
    %28 = memref.load %arg4[%c1_42] : memref<8xf32, #tpu.memory_space<smem>>
    %c2_43 = arith.constant 2 : index
    %29 = memref.load %arg4[%c2_43] : memref<8xf32, #tpu.memory_space<smem>>
    %c3_44 = arith.constant 3 : index
    %30 = memref.load %arg4[%c3_44] : memref<8xf32, #tpu.memory_space<smem>>
    %c4_45 = arith.constant 4 : index
    %31 = memref.load %arg4[%c4_45] : memref<8xf32, #tpu.memory_space<smem>>
    %c5_46 = arith.constant 5 : index
    %32 = memref.load %arg4[%c5_46] : memref<8xf32, #tpu.memory_space<smem>>
    %c6_47 = arith.constant 6 : index
    %33 = memref.load %arg4[%c6_47] : memref<8xf32, #tpu.memory_space<smem>>
    %c7_48 = arith.constant 7 : index
    %34 = memref.load %arg4[%c7_48] : memref<8xf32, #tpu.memory_space<smem>>
    %cst = arith.constant 0.000000e+00 : f32
    %35 = vector.broadcast %cst : f32 to vector<2x128xf32>
    %c0_49 = arith.constant 0 : index
    %c0_50 = arith.constant 0 : index
    %c0_51 = arith.constant 0 : index
    %36 = vector.load %arg2[%c0_49, %c0_50, %c0_51] : memref<6x2x128xf32, #tpu.memory_space<vmem>>, vector<1x2x128xf32>
    %37 = vector.shape_cast %36 : vector<1x2x128xf32> to vector<2x128xf32>
    %c1_52 = arith.constant 1 : index
    %c0_53 = arith.constant 0 : index
    %c0_54 = arith.constant 0 : index
    %38 = vector.load %arg2[%c1_52, %c0_53, %c0_54] : memref<6x2x128xf32, #tpu.memory_space<vmem>>, vector<1x2x128xf32>
    %39 = vector.shape_cast %38 : vector<1x2x128xf32> to vector<2x128xf32>
    %c2_55 = arith.constant 2 : index
    %c0_56 = arith.constant 0 : index
    %c0_57 = arith.constant 0 : index
    %40 = vector.load %arg2[%c2_55, %c0_56, %c0_57] : memref<6x2x128xf32, #tpu.memory_space<vmem>>, vector<1x2x128xf32>
    %41 = vector.shape_cast %40 : vector<1x2x128xf32> to vector<2x128xf32>
    %42 = vector.broadcast %3 : f32 to vector<2x128xf32>
    %43 = arith.mulf %37, %42 : vector<2x128xf32>
    %44 = vector.broadcast %4 : f32 to vector<2x128xf32>
    %45 = arith.mulf %39, %44 : vector<2x128xf32>
    %46 = arith.addf %43, %45 : vector<2x128xf32>
    %47 = vector.broadcast %5 : f32 to vector<2x128xf32>
    %48 = arith.mulf %41, %47 : vector<2x128xf32>
    %49 = arith.addf %46, %48 : vector<2x128xf32>
    %50 = vector.broadcast %27 : f32 to vector<2x128xf32>
    %51 = arith.addf %49, %50 : vector<2x128xf32>
    %cst_58 = arith.constant 5.000000e-01 : f32
    %52 = vector.broadcast %cst_58 : f32 to vector<2x128xf32>
    %53 = arith.mulf %51, %52 : vector<2x128xf32>
    %cst_59 = arith.constant 0.707106769 : f32
    %54 = vector.broadcast %cst_59 : f32 to vector<2x128xf32>
    %55 = arith.mulf %51, %54 : vector<2x128xf32>
    %56 = math.erf %55 : vector<2x128xf32>
    %cst_60 = arith.constant 1.000000e+00 : f32
    %57 = vector.broadcast %cst_60 : f32 to vector<2x128xf32>
    %58 = arith.addf %56, %57 : vector<2x128xf32>
    %59 = arith.mulf %53, %58 : vector<2x128xf32>
    %60 = vector.broadcast %6 : f32 to vector<2x128xf32>
    %61 = arith.mulf %37, %60 : vector<2x128xf32>
    %62 = vector.broadcast %7 : f32 to vector<2x128xf32>
    %63 = arith.mulf %39, %62 : vector<2x128xf32>
    %64 = arith.addf %61, %63 : vector<2x128xf32>
    %65 = vector.broadcast %8 : f32 to vector<2x128xf32>
    %66 = arith.mulf %41, %65 : vector<2x128xf32>
    %67 = arith.addf %64, %66 : vector<2x128xf32>
    %68 = vector.broadcast %28 : f32 to vector<2x128xf32>
    %69 = arith.addf %67, %68 : vector<2x128xf32>
    %cst_61 = arith.constant 5.000000e-01 : f32
    %70 = vector.broadcast %cst_61 : f32 to vector<2x128xf32>
    %71 = arith.mulf %69, %70 : vector<2x128xf32>
    %cst_62 = arith.constant 0.707106769 : f32
    %72 = vector.broadcast %cst_62 : f32 to vector<2x128xf32>
    %73 = arith.mulf %69, %72 : vector<2x128xf32>
    %74 = math.erf %73 : vector<2x128xf32>
    %cst_63 = arith.constant 1.000000e+00 : f32
    %75 = vector.broadcast %cst_63 : f32 to vector<2x128xf32>
    %76 = arith.addf %74, %75 : vector<2x128xf32>
    %77 = arith.mulf %71, %76 : vector<2x128xf32>
    %78 = vector.broadcast %9 : f32 to vector<2x128xf32>
    %79 = arith.mulf %37, %78 : vector<2x128xf32>
    %80 = vector.broadcast %10 : f32 to vector<2x128xf32>
    %81 = arith.mulf %39, %80 : vector<2x128xf32>
    %82 = arith.addf %79, %81 : vector<2x128xf32>
    %83 = vector.broadcast %11 : f32 to vector<2x128xf32>
    %84 = arith.mulf %41, %83 : vector<2x128xf32>
    %85 = arith.addf %82, %84 : vector<2x128xf32>
    %86 = vector.broadcast %29 : f32 to vector<2x128xf32>
    %87 = arith.addf %85, %86 : vector<2x128xf32>
    %cst_64 = arith.constant 5.000000e-01 : f32
    %88 = vector.broadcast %cst_64 : f32 to vector<2x128xf32>
    %89 = arith.mulf %87, %88 : vector<2x128xf32>
    %cst_65 = arith.constant 0.707106769 : f32
    %90 = vector.broadcast %cst_65 : f32 to vector<2x128xf32>
    %91 = arith.mulf %87, %90 : vector<2x128xf32>
    %92 = math.erf %91 : vector<2x128xf32>
    %cst_66 = arith.constant 1.000000e+00 : f32
    %93 = vector.broadcast %cst_66 : f32 to vector<2x128xf32>
    %94 = arith.addf %92, %93 : vector<2x128xf32>
    %95 = arith.mulf %89, %94 : vector<2x128xf32>
    %96 = vector.broadcast %12 : f32 to vector<2x128xf32>
    %97 = arith.mulf %37, %96 : vector<2x128xf32>
    %98 = vector.broadcast %13 : f32 to vector<2x128xf32>
    %99 = arith.mulf %39, %98 : vector<2x128xf32>
    %100 = arith.addf %97, %99 : vector<2x128xf32>
    %101 = vector.broadcast %14 : f32 to vector<2x128xf32>
    %102 = arith.mulf %41, %101 : vector<2x128xf32>
    %103 = arith.addf %100, %102 : vector<2x128xf32>
    %104 = vector.broadcast %30 : f32 to vector<2x128xf32>
    %105 = arith.addf %103, %104 : vector<2x128xf32>
    %cst_67 = arith.constant 5.000000e-01 : f32
    %106 = vector.broadcast %cst_67 : f32 to vector<2x128xf32>
    %107 = arith.mulf %105, %106 : vector<2x128xf32>
    %cst_68 = arith.constant 0.707106769 : f32
    %108 = vector.broadcast %cst_68 : f32 to vector<2x128xf32>
    %109 = arith.mulf %105, %108 : vector<2x128xf32>
    %110 = math.erf %109 : vector<2x128xf32>
    %cst_69 = arith.constant 1.000000e+00 : f32
    %111 = vector.broadcast %cst_69 : f32 to vector<2x128xf32>
    %112 = arith.addf %110, %111 : vector<2x128xf32>
    %113 = arith.mulf %107, %112 : vector<2x128xf32>
    %114 = vector.broadcast %15 : f32 to vector<2x128xf32>
    %115 = arith.mulf %37, %114 : vector<2x128xf32>
    %116 = vector.broadcast %16 : f32 to vector<2x128xf32>
    %117 = arith.mulf %39, %116 : vector<2x128xf32>
    %118 = arith.addf %115, %117 : vector<2x128xf32>
    %119 = vector.broadcast %17 : f32 to vector<2x128xf32>
    %120 = arith.mulf %41, %119 : vector<2x128xf32>
    %121 = arith.addf %118, %120 : vector<2x128xf32>
    %122 = vector.broadcast %31 : f32 to vector<2x128xf32>
    %123 = arith.addf %121, %122 : vector<2x128xf32>
    %cst_70 = arith.constant 5.000000e-01 : f32
    %124 = vector.broadcast %cst_70 : f32 to vector<2x128xf32>
    %125 = arith.mulf %123, %124 : vector<2x128xf32>
    %cst_71 = arith.constant 0.707106769 : f32
    %126 = vector.broadcast %cst_71 : f32 to vector<2x128xf32>
    %127 = arith.mulf %123, %126 : vector<2x128xf32>
    %128 = math.erf %127 : vector<2x128xf32>
    %cst_72 = arith.constant 1.000000e+00 : f32
    %129 = vector.broadcast %cst_72 : f32 to vector<2x128xf32>
    %130 = arith.addf %128, %129 : vector<2x128xf32>
    %131 = arith.mulf %125, %130 : vector<2x128xf32>
    %132 = vector.broadcast %18 : f32 to vector<2x128xf32>
    %133 = arith.mulf %37, %132 : vector<2x128xf32>
    %134 = vector.broadcast %19 : f32 to vector<2x128xf32>
    %135 = arith.mulf %39, %134 : vector<2x128xf32>
    %136 = arith.addf %133, %135 : vector<2x128xf32>
    %137 = vector.broadcast %20 : f32 to vector<2x128xf32>
    %138 = arith.mulf %41, %137 : vector<2x128xf32>
    %139 = arith.addf %136, %138 : vector<2x128xf32>
    %140 = vector.broadcast %32 : f32 to vector<2x128xf32>
    %141 = arith.addf %139, %140 : vector<2x128xf32>
    %cst_73 = arith.constant 5.000000e-01 : f32
    %142 = vector.broadcast %cst_73 : f32 to vector<2x128xf32>
    %143 = arith.mulf %141, %142 : vector<2x128xf32>
    %cst_74 = arith.constant 0.707106769 : f32
    %144 = vector.broadcast %cst_74 : f32 to vector<2x128xf32>
    %145 = arith.mulf %141, %144 : vector<2x128xf32>
    %146 = math.erf %145 : vector<2x128xf32>
    %cst_75 = arith.constant 1.000000e+00 : f32
    %147 = vector.broadcast %cst_75 : f32 to vector<2x128xf32>
    %148 = arith.addf %146, %147 : vector<2x128xf32>
    %149 = arith.mulf %143, %148 : vector<2x128xf32>
    %150 = vector.broadcast %21 : f32 to vector<2x128xf32>
    %151 = arith.mulf %37, %150 : vector<2x128xf32>
    %152 = vector.broadcast %22 : f32 to vector<2x128xf32>
    %153 = arith.mulf %39, %152 : vector<2x128xf32>
    %154 = arith.addf %151, %153 : vector<2x128xf32>
    %155 = vector.broadcast %23 : f32 to vector<2x128xf32>
    %156 = arith.mulf %41, %155 : vector<2x128xf32>
    %157 = arith.addf %154, %156 : vector<2x128xf32>
    %158 = vector.broadcast %33 : f32 to vector<2x128xf32>
    %159 = arith.addf %157, %158 : vector<2x128xf32>
    %cst_76 = arith.constant 5.000000e-01 : f32
    %160 = vector.broadcast %cst_76 : f32 to vector<2x128xf32>
    %161 = arith.mulf %159, %160 : vector<2x128xf32>
    %cst_77 = arith.constant 0.707106769 : f32
    %162 = vector.broadcast %cst_77 : f32 to vector<2x128xf32>
    %163 = arith.mulf %159, %162 : vector<2x128xf32>
    %164 = math.erf %163 : vector<2x128xf32>
    %cst_78 = arith.constant 1.000000e+00 : f32
    %165 = vector.broadcast %cst_78 : f32 to vector<2x128xf32>
    %166 = arith.addf %164, %165 : vector<2x128xf32>
    %167 = arith.mulf %161, %166 : vector<2x128xf32>
    %168 = vector.broadcast %24 : f32 to vector<2x128xf32>
    %169 = arith.mulf %37, %168 : vector<2x128xf32>
    %170 = vector.broadcast %25 : f32 to vector<2x128xf32>
    %171 = arith.mulf %39, %170 : vector<2x128xf32>
    %172 = arith.addf %169, %171 : vector<2x128xf32>
    %173 = vector.broadcast %26 : f32 to vector<2x128xf32>
    %174 = arith.mulf %41, %173 : vector<2x128xf32>
    %175 = arith.addf %172, %174 : vector<2x128xf32>
    %176 = vector.broadcast %34 : f32 to vector<2x128xf32>
    %177 = arith.addf %175, %176 : vector<2x128xf32>
    %cst_79 = arith.constant 5.000000e-01 : f32
    %178 = vector.broadcast %cst_79 : f32 to vector<2x128xf32>
    %179 = arith.mulf %177, %178 : vector<2x128xf32>
    %cst_80 = arith.constant 0.707106769 : f32
    %180 = vector.broadcast %cst_80 : f32 to vector<2x128xf32>
    %181 = arith.mulf %177, %180 : vector<2x128xf32>
    %182 = math.erf %181 : vector<2x128xf32>
    %cst_81 = arith.constant 1.000000e+00 : f32
    %183 = vector.broadcast %cst_81 : f32 to vector<2x128xf32>
    %184 = arith.addf %182, %183 : vector<2x128xf32>
    %185 = arith.mulf %179, %184 : vector<2x128xf32>
    %186 = arith.addf %59, %77 : vector<2x128xf32>
    %187 = arith.addf %95, %113 : vector<2x128xf32>
    %188 = arith.addf %131, %149 : vector<2x128xf32>
    %189 = arith.addf %167, %185 : vector<2x128xf32>
    %190 = arith.addf %186, %187 : vector<2x128xf32>
    %191 = arith.addf %188, %189 : vector<2x128xf32>
    %192 = arith.addf %190, %191 : vector<2x128xf32>
    %c3_82 = arith.constant 3 : index
    %c0_83 = arith.constant 0 : index
    %c0_84 = arith.constant 0 : index
    %193 = vector.load %arg2[%c3_82, %c0_83, %c0_84] : memref<6x2x128xf32, #tpu.memory_space<vmem>>, vector<1x2x128xf32>
    %194 = vector.shape_cast %193 : vector<1x2x128xf32> to vector<2x128xf32>
    %c4_85 = arith.constant 4 : index
    %c0_86 = arith.constant 0 : index
    %c0_87 = arith.constant 0 : index
    %195 = vector.load %arg2[%c4_85, %c0_86, %c0_87] : memref<6x2x128xf32, #tpu.memory_space<vmem>>, vector<1x2x128xf32>
    %196 = vector.shape_cast %195 : vector<1x2x128xf32> to vector<2x128xf32>
    %c5_88 = arith.constant 5 : index
    %c0_89 = arith.constant 0 : index
    %c0_90 = arith.constant 0 : index
    %197 = vector.load %arg2[%c5_88, %c0_89, %c0_90] : memref<6x2x128xf32, #tpu.memory_space<vmem>>, vector<1x2x128xf32>
    %198 = vector.shape_cast %197 : vector<1x2x128xf32> to vector<2x128xf32>
    %199 = vector.broadcast %3 : f32 to vector<2x128xf32>
    %200 = arith.mulf %194, %199 : vector<2x128xf32>
    %201 = vector.broadcast %4 : f32 to vector<2x128xf32>
    %202 = arith.mulf %196, %201 : vector<2x128xf32>
    %203 = arith.addf %200, %202 : vector<2x128xf32>
    %204 = vector.broadcast %5 : f32 to vector<2x128xf32>
    %205 = arith.mulf %198, %204 : vector<2x128xf32>
    %206 = arith.addf %203, %205 : vector<2x128xf32>
    %207 = vector.broadcast %27 : f32 to vector<2x128xf32>
    %208 = arith.addf %206, %207 : vector<2x128xf32>
    %cst_91 = arith.constant 5.000000e-01 : f32
    %209 = vector.broadcast %cst_91 : f32 to vector<2x128xf32>
    %210 = arith.mulf %208, %209 : vector<2x128xf32>
    %cst_92 = arith.constant 0.707106769 : f32
    %211 = vector.broadcast %cst_92 : f32 to vector<2x128xf32>
    %212 = arith.mulf %208, %211 : vector<2x128xf32>
    %213 = math.erf %212 : vector<2x128xf32>
    %cst_93 = arith.constant 1.000000e+00 : f32
    %214 = vector.broadcast %cst_93 : f32 to vector<2x128xf32>
    %215 = arith.addf %213, %214 : vector<2x128xf32>
    %216 = arith.mulf %210, %215 : vector<2x128xf32>
    %217 = vector.broadcast %6 : f32 to vector<2x128xf32>
    %218 = arith.mulf %194, %217 : vector<2x128xf32>
    %219 = vector.broadcast %7 : f32 to vector<2x128xf32>
    %220 = arith.mulf %196, %219 : vector<2x128xf32>
    %221 = arith.addf %218, %220 : vector<2x128xf32>
    %222 = vector.broadcast %8 : f32 to vector<2x128xf32>
    %223 = arith.mulf %198, %222 : vector<2x128xf32>
    %224 = arith.addf %221, %223 : vector<2x128xf32>
    %225 = vector.broadcast %28 : f32 to vector<2x128xf32>
    %226 = arith.addf %224, %225 : vector<2x128xf32>
    %cst_94 = arith.constant 5.000000e-01 : f32
    %227 = vector.broadcast %cst_94 : f32 to vector<2x128xf32>
    %228 = arith.mulf %226, %227 : vector<2x128xf32>
    %cst_95 = arith.constant 0.707106769 : f32
    %229 = vector.broadcast %cst_95 : f32 to vector<2x128xf32>
    %230 = arith.mulf %226, %229 : vector<2x128xf32>
    %231 = math.erf %230 : vector<2x128xf32>
    %cst_96 = arith.constant 1.000000e+00 : f32
    %232 = vector.broadcast %cst_96 : f32 to vector<2x128xf32>
    %233 = arith.addf %231, %232 : vector<2x128xf32>
    %234 = arith.mulf %228, %233 : vector<2x128xf32>
    %235 = vector.broadcast %9 : f32 to vector<2x128xf32>
    %236 = arith.mulf %194, %235 : vector<2x128xf32>
    %237 = vector.broadcast %10 : f32 to vector<2x128xf32>
    %238 = arith.mulf %196, %237 : vector<2x128xf32>
    %239 = arith.addf %236, %238 : vector<2x128xf32>
    %240 = vector.broadcast %11 : f32 to vector<2x128xf32>
    %241 = arith.mulf %198, %240 : vector<2x128xf32>
    %242 = arith.addf %239, %241 : vector<2x128xf32>
    %243 = vector.broadcast %29 : f32 to vector<2x128xf32>
    %244 = arith.addf %242, %243 : vector<2x128xf32>
    %cst_97 = arith.constant 5.000000e-01 : f32
    %245 = vector.broadcast %cst_97 : f32 to vector<2x128xf32>
    %246 = arith.mulf %244, %245 : vector<2x128xf32>
    %cst_98 = arith.constant 0.707106769 : f32
    %247 = vector.broadcast %cst_98 : f32 to vector<2x128xf32>
    %248 = arith.mulf %244, %247 : vector<2x128xf32>
    %249 = math.erf %248 : vector<2x128xf32>
    %cst_99 = arith.constant 1.000000e+00 : f32
    %250 = vector.broadcast %cst_99 : f32 to vector<2x128xf32>
    %251 = arith.addf %249, %250 : vector<2x128xf32>
    %252 = arith.mulf %246, %251 : vector<2x128xf32>
    %253 = vector.broadcast %12 : f32 to vector<2x128xf32>
    %254 = arith.mulf %194, %253 : vector<2x128xf32>
    %255 = vector.broadcast %13 : f32 to vector<2x128xf32>
    %256 = arith.mulf %196, %255 : vector<2x128xf32>
    %257 = arith.addf %254, %256 : vector<2x128xf32>
    %258 = vector.broadcast %14 : f32 to vector<2x128xf32>
    %259 = arith.mulf %198, %258 : vector<2x128xf32>
    %260 = arith.addf %257, %259 : vector<2x128xf32>
    %261 = vector.broadcast %30 : f32 to vector<2x128xf32>
    %262 = arith.addf %260, %261 : vector<2x128xf32>
    %cst_100 = arith.constant 5.000000e-01 : f32
    %263 = vector.broadcast %cst_100 : f32 to vector<2x128xf32>
    %264 = arith.mulf %262, %263 : vector<2x128xf32>
    %cst_101 = arith.constant 0.707106769 : f32
    %265 = vector.broadcast %cst_101 : f32 to vector<2x128xf32>
    %266 = arith.mulf %262, %265 : vector<2x128xf32>
    %267 = math.erf %266 : vector<2x128xf32>
    %cst_102 = arith.constant 1.000000e+00 : f32
    %268 = vector.broadcast %cst_102 : f32 to vector<2x128xf32>
    %269 = arith.addf %267, %268 : vector<2x128xf32>
    %270 = arith.mulf %264, %269 : vector<2x128xf32>
    %271 = vector.broadcast %15 : f32 to vector<2x128xf32>
    %272 = arith.mulf %194, %271 : vector<2x128xf32>
    %273 = vector.broadcast %16 : f32 to vector<2x128xf32>
    %274 = arith.mulf %196, %273 : vector<2x128xf32>
    %275 = arith.addf %272, %274 : vector<2x128xf32>
    %276 = vector.broadcast %17 : f32 to vector<2x128xf32>
    %277 = arith.mulf %198, %276 : vector<2x128xf32>
    %278 = arith.addf %275, %277 : vector<2x128xf32>
    %279 = vector.broadcast %31 : f32 to vector<2x128xf32>
    %280 = arith.addf %278, %279 : vector<2x128xf32>
    %cst_103 = arith.constant 5.000000e-01 : f32
    %281 = vector.broadcast %cst_103 : f32 to vector<2x128xf32>
    %282 = arith.mulf %280, %281 : vector<2x128xf32>
    %cst_104 = arith.constant 0.707106769 : f32
    %283 = vector.broadcast %cst_104 : f32 to vector<2x128xf32>
    %284 = arith.mulf %280, %283 : vector<2x128xf32>
    %285 = math.erf %284 : vector<2x128xf32>
    %cst_105 = arith.constant 1.000000e+00 : f32
    %286 = vector.broadcast %cst_105 : f32 to vector<2x128xf32>
    %287 = arith.addf %285, %286 : vector<2x128xf32>
    %288 = arith.mulf %282, %287 : vector<2x128xf32>
    %289 = vector.broadcast %18 : f32 to vector<2x128xf32>
    %290 = arith.mulf %194, %289 : vector<2x128xf32>
    %291 = vector.broadcast %19 : f32 to vector<2x128xf32>
    %292 = arith.mulf %196, %291 : vector<2x128xf32>
    %293 = arith.addf %290, %292 : vector<2x128xf32>
    %294 = vector.broadcast %20 : f32 to vector<2x128xf32>
    %295 = arith.mulf %198, %294 : vector<2x128xf32>
    %296 = arith.addf %293, %295 : vector<2x128xf32>
    %297 = vector.broadcast %32 : f32 to vector<2x128xf32>
    %298 = arith.addf %296, %297 : vector<2x128xf32>
    %cst_106 = arith.constant 5.000000e-01 : f32
    %299 = vector.broadcast %cst_106 : f32 to vector<2x128xf32>
    %300 = arith.mulf %298, %299 : vector<2x128xf32>
    %cst_107 = arith.constant 0.707106769 : f32
    %301 = vector.broadcast %cst_107 : f32 to vector<2x128xf32>
    %302 = arith.mulf %298, %301 : vector<2x128xf32>
    %303 = math.erf %302 : vector<2x128xf32>
    %cst_108 = arith.constant 1.000000e+00 : f32
    %304 = vector.broadcast %cst_108 : f32 to vector<2x128xf32>
    %305 = arith.addf %303, %304 : vector<2x128xf32>
    %306 = arith.mulf %300, %305 : vector<2x128xf32>
    %307 = vector.broadcast %21 : f32 to vector<2x128xf32>
    %308 = arith.mulf %194, %307 : vector<2x128xf32>
    %309 = vector.broadcast %22 : f32 to vector<2x128xf32>
    %310 = arith.mulf %196, %309 : vector<2x128xf32>
    %311 = arith.addf %308, %310 : vector<2x128xf32>
    %312 = vector.broadcast %23 : f32 to vector<2x128xf32>
    %313 = arith.mulf %198, %312 : vector<2x128xf32>
    %314 = arith.addf %311, %313 : vector<2x128xf32>
    %315 = vector.broadcast %33 : f32 to vector<2x128xf32>
    %316 = arith.addf %314, %315 : vector<2x128xf32>
    %cst_109 = arith.constant 5.000000e-01 : f32
    %317 = vector.broadcast %cst_109 : f32 to vector<2x128xf32>
    %318 = arith.mulf %316, %317 : vector<2x128xf32>
    %cst_110 = arith.constant 0.707106769 : f32
    %319 = vector.broadcast %cst_110 : f32 to vector<2x128xf32>
    %320 = arith.mulf %316, %319 : vector<2x128xf32>
    %321 = math.erf %320 : vector<2x128xf32>
    %cst_111 = arith.constant 1.000000e+00 : f32
    %322 = vector.broadcast %cst_111 : f32 to vector<2x128xf32>
    %323 = arith.addf %321, %322 : vector<2x128xf32>
    %324 = arith.mulf %318, %323 : vector<2x128xf32>
    %325 = vector.broadcast %24 : f32 to vector<2x128xf32>
    %326 = arith.mulf %194, %325 : vector<2x128xf32>
    %327 = vector.broadcast %25 : f32 to vector<2x128xf32>
    %328 = arith.mulf %196, %327 : vector<2x128xf32>
    %329 = arith.addf %326, %328 : vector<2x128xf32>
    %330 = vector.broadcast %26 : f32 to vector<2x128xf32>
    %331 = arith.mulf %198, %330 : vector<2x128xf32>
    %332 = arith.addf %329, %331 : vector<2x128xf32>
    %333 = vector.broadcast %34 : f32 to vector<2x128xf32>
    %334 = arith.addf %332, %333 : vector<2x128xf32>
    %cst_112 = arith.constant 5.000000e-01 : f32
    %335 = vector.broadcast %cst_112 : f32 to vector<2x128xf32>
    %336 = arith.mulf %334, %335 : vector<2x128xf32>
    %cst_113 = arith.constant 0.707106769 : f32
    %337 = vector.broadcast %cst_113 : f32 to vector<2x128xf32>
    %338 = arith.mulf %334, %337 : vector<2x128xf32>
    %339 = math.erf %338 : vector<2x128xf32>
    %cst_114 = arith.constant 1.000000e+00 : f32
    %340 = vector.broadcast %cst_114 : f32 to vector<2x128xf32>
    %341 = arith.addf %339, %340 : vector<2x128xf32>
    %342 = arith.mulf %336, %341 : vector<2x128xf32>
    %343 = arith.addf %216, %234 : vector<2x128xf32>
    %344 = arith.addf %252, %270 : vector<2x128xf32>
    %345 = arith.addf %288, %306 : vector<2x128xf32>
    %346 = arith.addf %324, %342 : vector<2x128xf32>
    %347 = arith.addf %343, %344 : vector<2x128xf32>
    %348 = arith.addf %345, %346 : vector<2x128xf32>
    %349 = arith.addf %347, %348 : vector<2x128xf32>
    %350 = arith.addf %192, %349 : vector<2x128xf32>
    %351 = arith.addf %35, %350 : vector<2x128xf32>
    %c0_115 = arith.constant 0 : index
    %c0_116 = arith.constant 0 : index
    %352 = vector.load %arg6[%c0_115, %c0_116] : memref<2x128xf32, #tpu.memory_space<vmem>>, vector<2x128xf32>
    %353 = arith.addf %352, %351 : vector<2x128xf32>
    %c0_117 = arith.constant 0 : index
    %c0_118 = arith.constant 0 : index
    %354 = vector.load %arg6[%c0_117, %c0_118] : memref<2x128xf32, #tpu.memory_space<vmem>>, vector<2x128xf32>
    tpu.vector_store %arg6[%c0_117, %c0_118], %353 {strides = array<i32>} : memref<2x128xf32, #tpu.memory_space<vmem>>, vector<2x128xf32>,
    %c0_i32_119 = arith.constant 0 : i32
    %355 = arith.cmpi eq, %arg1, %c0_i32_119 : i32
    %356 = arith.extui %355 : i1 to i32
    %c0_i32_120 = arith.constant 0 : i32
    %357 = arith.cmpi ne, %356, %c0_i32_120 : i32
    scf.if %357 {
      %c0_121 = arith.constant 0 : index
      %c0_122 = arith.constant 0 : index
      %358 = vector.load %arg6[%c0_121, %c0_122] : memref<2x128xf32, #tpu.memory_space<vmem>>, vector<2x128xf32>
      %359 = vector.shape_cast %358 : vector<2x128xf32> to vector<1x2x128xf32>
      %cst_123 = arith.constant dense<0.000000e+00> : vector<1xf32>
      %360 = vector.multi_reduction <add>, %359, %cst_123 [1, 2] : vector<1x2x128xf32> to vector<1xf32>
      %361 = vector.shape_cast %360 : vector<1xf32> to vector<1x1x1xf32>
      %362 = vector.extract %361[0, 0, 0] : f32 from vector<1x1x1xf32>
      %c0_124 = arith.constant 0 : index
      %c0_125 = arith.constant 0 : index
      %363 = memref.load %arg5[%c0_124, %c0_125] : memref<1x1xf32, #tpu.memory_space<smem>>
      memref.store %362, %arg5[%c0_124, %c0_125] : memref<1x1xf32, #tpu.memory_space<smem>>
    } else {
    }
    return
  }
  func.func @transform_0(%arg0: i32, %arg1: i32) -> (i32, i32, i32) {
    %c1_i32 = arith.constant 1 : i32
    %0 = arith.muli %arg0, %c1_i32 : i32
    %1 = arith.addi %0, %arg1 : i32
    %c0_i32 = arith.constant 0 : i32
    %c0_i32_0 = arith.constant 0 : i32
    %c0_i32_1 = arith.constant 0 : i32
    return %c0_i32, %1, %c0_i32_0 : i32, i32, i32
  }
  func.func @transform_1(%arg0: i32, %arg1: i32) -> (i32, i32) {
    %c0_i32 = arith.constant 0 : i32
    %c0_i32_0 = arith.constant 0 : i32
    %c0_i32_1 = arith.constant 0 : i32
    return %c0_i32, %c0_i32_0 : i32, i32
  }
  func.func @transform_2(%arg0: i32, %arg1: i32) -> i32 {
    %c0_i32 = arith.constant 0 : i32
    %c0_i32_0 = arith.constant 0 : i32
    return %c0_i32 : i32
  }
  func.func @transform_3(%arg0: i32, %arg1: i32) -> (i32, i32) {
    %c0_i32 = arith.constant 0 : i32
    %c0_i32_0 = arith.constant 0 : i32
    return %arg0, %c0_i32 : i32, i32
  }
}

</mosaic_0001>

<llo_original>
// kernel: tpu_custom_call.1
$region0: #{tpu_custom_call.1}
  #allocation0 [shape = 'u32[]', space=smem, size = 0x4, offset = 0x4, fixed_abs, tag = 'smem constant byte address 0x4 - core index']
  #allocation1 [shape = 'u32[144,128]{1,0:T(1,128)}', space=vmem, size = 0x12000, scoped, tag = 'internal scratch']
  #allocation2 [shape = 'f32[2,128]{1,0:T(2,128)}', space=vmem, size = 0x400, scoped, tag = 'scratch operand']
  %s0 = inlined_call_operand.vmem [shape: f32[6,2,128], index: 0, kind: input, shape index: {}]
  %s1 = inlined_call_operand.vmem [shape: f32[8,3], index: 1, kind: input, shape index: {}]
  %s2 = inlined_call_operand.vmem [shape: f32[8], index: 2, kind: input, shape index: {}]
  %s3 = inlined_call_operand.hbm [shape: f32[1,1], index: 3, kind: output, shape index: {}]
  %s4 = sld [smem:[#allocation0]]
  $region38: #{tpu_custom_call.1} parent=0
    _
  %s6 = ssub.s32 1, %s4
  %s7 = scalar_select 0, %s6, %s4
  $region1: #{tpu_custom_call.1} parent=0
    #allocation3 [shape = 'u8[4096]{0}', space=smem, size = 0x1000, scoped, tag = 'input window, operand 1, single buffered']
    #allocation4 [shape = 's32[1]{0}', space=sflag, size = 0x4, scoped, tag = 'scoped memory for tpu_custom_call.1']
    #allocation5 [shape = 's32[1]{0}', space=sflag, size = 0x4, scoped, tag = 'scoped memory for tpu_custom_call.1']
    #allocation6 [shape = 'u8[512]{0}', space=smem, size = 0x200, scoped, tag = 'input window, operand 2, single buffered']
    #allocation7 [shape = 's32[1]{0}', space=sflag, size = 0x4, scoped, tag = 'scoped memory for tpu_custom_call.1']
    #allocation8 [shape = 'u8[512]{0}', space=smem, size = 0x200, scoped, tag = 'output window, operand 0, single buffered']
    %8 = vsyncpa [#allocation5], 0
    %9 = vsyncpa [#allocation7], 0
    %10 = vsyncpa [#allocation4], 0
    // Predicated region
    $region2: #{tpu_custom_call.1} parent=1 // pred_check
      _
    $region3: #{tpu_custom_call.1} parent=1 // pred_check_branch
      %12 = sbr.rel (0) target = $region5
    $region4: #{tpu_custom_call.1} parent=1 // pred_region
      %s13 = sadd.s32 0, 0
      %p14 = scmp.lt.s32.totalorder %s13, 0
      %s15 = scalar_select %p14, %s13, 0
      %s16 = smul.addr %s15, 2
      %s17 = scalar_lea.vmem %s0, %s16
      %s18 = sadd.s32 0, 0
    $region5: #{tpu_custom_call.1} parent=1 // pred_fallthru
      _
    // Predicated region
    $region6: #{tpu_custom_call.1} parent=1 // pred_check
      _
    $region7: #{tpu_custom_call.1} parent=1 // pred_check_branch
      %20 = sbr.rel (0) target = $region9
    $region8: #{tpu_custom_call.1} parent=1 // pred_region
      %s22 = ssub.s32 128, 128
      %23 = vsyncadd [#allocation5], %s22
      %s25 = sshll.u32 %s1, 4
      %s26 = int_to_ptr.vmem [resolvable:$true] %s25
      %28 = dma.vmem_to_smem %s26, 128, [#allocation3], [#allocation5]
    $region9: #{tpu_custom_call.1} parent=1 // pred_fallthru
      _
    // Predicated region
    $region10: #{tpu_custom_call.1} parent=1 // pred_check
      _
    $region11: #{tpu_custom_call.1} parent=1 // pred_check_branch
      %30 = sbr.rel (0) target = $region13
    $region12: #{tpu_custom_call.1} parent=1 // pred_region
      %s32 = ssub.s32 16, 16
      %33 = vsyncadd [#allocation7], %s32
      %s35 = sshll.u32 %s2, 4
      %s36 = int_to_ptr.vmem [resolvable:$true] %s35
      %38 = dma.vmem_to_smem %s36, 16, [#allocation6], [#allocation7]
    $region13: #{tpu_custom_call.1} parent=1 // pred_fallthru
      _
    // Predicated region
    $region14: #{tpu_custom_call.1} parent=1 // pred_check
      _
    $region15: #{tpu_custom_call.1} parent=1 // pred_check_branch
      %40 = sbr.rel (0) target = $region17
    $region16: #{tpu_custom_call.1} parent=1 // pred_region
      %41 = dma.done [#allocation5], 128
    $region17: #{tpu_custom_call.1} parent=1 // pred_fallthru
      _
    // Predicated region
    $region18: #{tpu_custom_call.1} parent=1 // pred_check
      _
    $region19: #{tpu_custom_call.1} parent=1 // pred_check_branch
      %43 = sbr.rel (0) target = $region21
    $region20: #{tpu_custom_call.1} parent=1 // pred_region
      %44 = dma.done [#allocation7], 16
    $region21: #{tpu_custom_call.1} parent=1 // pred_fallthru
      _
    %45 = sfence
    %s46 = sadd.s32 0, 0
    %p47 = scmp.lt.s32.totalorder %s46, 0
    %s48 = scalar_select %p47, %s46, 0
    %s49 = smul.addr %s48, 2
    %s50 = scalar_lea.vmem %s0, %s49
    %s51 = sadd.s32 0, 0
    %p52 = scmp.lt.s32.totalorder %s51, 0
    %s53 = scalar_select %p52, %s51, 0
    %s54 = smul.addr %s53, 2
    %s55 = scalar_lea.vmem %s0, %s54
    %s56 = sadd.s32 0, 0
    %p57 = scmp.eq.s32.totalorder 0, 0
    // Predicated region
    $region22: #{tpu_custom_call.1} parent=1 // pred_check
      %p58 = pneg %p57
    $region23: #{tpu_custom_call.1} parent=1 // pred_check_branch
      %60 = sbr.rel (%p58) target = $region25
    $region24: #{tpu_custom_call.1} parent=1 // pred_region
      %61 = vst [vmem:[#allocation2] sm:$0x3] 0.0
    $region25: #{tpu_custom_call.1} parent=1 // pred_fallthru
      _
    %s62 = sld [smem:[#allocation3]]
    %s63 = sld [smem:[#allocation3 + $0x1]]
    %s64 = sld [smem:[#allocation3 + $0x2]]
    %s65 = sld [smem:[#allocation3 + $0x80]]
    %s66 = sld [smem:[#allocation3 + $0x81]]
    %s67 = sld [smem:[#allocation3 + $0x82]]
    %s68 = sld [smem:[#allocation3 + $0x100]]
    %s69 = sld [smem:[#allocation3 + $0x101]]
    %s70 = sld [smem:[#allocation3 + $0x102]]
    %s71 = sld [smem:[#allocation3 + $0x180]]
    %s72 = sld [smem:[#allocation3 + $0x181]]
    %s73 = sld [smem:[#allocation3 + $0x182]]
    %s74 = sld [smem:[#allocation3 + $0x200]]
    %s75 = sld [smem:[#allocation3 + $0x201]]
    %s76 = sld [smem:[#allocation3 + $0x202]]
    %s77 = sld [smem:[#allocation3 + $0x280]]
    %s78 = sld [smem:[#allocation3 + $0x281]]
    %s79 = sld [smem:[#allocation3 + $0x282]]
    %s80 = sld [smem:[#allocation3 + $0x300]]
    %s81 = sld [smem:[#allocation3 + $0x301]]
    %s82 = sld [smem:[#allocation3 + $0x302]]
    %s83 = sld [smem:[#allocation3 + $0x380]]
    %s84 = sld [smem:[#allocation3 + $0x381]]
    %s85 = sld [smem:[#allocation3 + $0x382]]
    %s86 = sld [smem:[#allocation6]]
    %s87 = sld [smem:[#allocation6 + $0x1]]
    %s88 = sld [smem:[#allocation6 + $0x2]]
    %s89 = sld [smem:[#allocation6 + $0x3]]
    %s90 = sld [smem:[#allocation6 + $0x4]]
    %s91 = sld [smem:[#allocation6 + $0x5]]
    %s92 = sld [smem:[#allocation6 + $0x6]]
    %s93 = sld [smem:[#allocation6 + $0x7]]
    %v94 = vld [vmem:[%s55] sm:$0x3]
    %s95 = scalar_lea.vmem %s55, 2
    %v96 = vld [vmem:[%s95] sm:$0x3]
    %s97 = scalar_lea.vmem %s55, 4
    %v98 = vld [vmem:[%s97] sm:$0x3]
    %v99 = vstv %s62
    %v100 = vmul.f32 %v94, %v99
    %v101 = vstv %s63
    %v102 = vmul.f32 %v96, %v101
    %v103 = vadd.f32 %v100, %v102
    %v104 = vstv %s64
    %v105 = vmul.f32 %v98, %v104
    %v106 = vadd.f32 %v103, %v105
    %v107 = vstv %s86
    %v108 = vadd.f32 %v106, %v107
    %v109 = vmul.f32 %v108, 0.5
    %v110 = vmul.f32 %v108, 0.70710677
    %v111 = verf.f32.pop %v110
    %v112 = vadd.f32 %v111, 1.0
    %v113 = vmul.f32 %v109, %v112
    %v114 = vstv %s65
    %v115 = vmul.f32 %v94, %v114
    %v116 = vstv %s66
    %v117 = vmul.f32 %v96, %v116
    %v118 = vadd.f32 %v115, %v117
    %v119 = vstv %s67
    %v120 = vmul.f32 %v98, %v119
    %v121 = vadd.f32 %v118, %v120
    %v122 = vstv %s87
    %v123 = vadd.f32 %v121, %v122
    %v124 = vmul.f32 %v123, 0.5
    %v125 = vmul.f32 %v123, 0.70710677
    %v126 = verf.f32.pop %v125
    %v127 = vadd.f32 %v126, 1.0
    %v128 = vmul.f32 %v124, %v127
    %v129 = vstv %s68
    %v130 = vmul.f32 %v94, %v129
    %v131 = vstv %s69
    %v132 = vmul.f32 %v96, %v131
    %v133 = vadd.f32 %v130, %v132
    %v134 = vstv %s70
    %v135 = vmul.f32 %v98, %v134
    %v136 = vadd.f32 %v133, %v135
    %v137 = vstv %s88
    %v138 = vadd.f32 %v136, %v137
    %v139 = vmul.f32 %v138, 0.5
    %v140 = vmul.f32 %v138, 0.70710677
    %v141 = verf.f32.pop %v140
    %v142 = vadd.f32 %v141, 1.0
    %v143 = vmul.f32 %v139, %v142
    %v144 = vstv %s71
    %v145 = vmul.f32 %v94, %v144
    %v146 = vstv %s72
    %v147 = vmul.f32 %v96, %v146
    %v148 = vadd.f32 %v145, %v147
    %v149 = vstv %s73
    %v150 = vmul.f32 %v98, %v149
    %v151 = vadd.f32 %v148, %v150
    %v152 = vstv %s89
    %v153 = vadd.f32 %v151, %v152
    %v154 = vmul.f32 %v153, 0.5
    %v155 = vmul.f32 %v153, 0.70710677
    %v156 = verf.f32.pop %v155
    %v157 = vadd.f32 %v156, 1.0
    %v158 = vmul.f32 %v154, %v157
    %v159 = vstv %s74
    %v160 = vmul.f32 %v94, %v159
    %v161 = vstv %s75
    %v162 = vmul.f32 %v96, %v161
    %v163 = vadd.f32 %v160, %v162
    %v164 = vstv %s76
    %v165 = vmul.f32 %v98, %v164
    %v166 = vadd.f32 %v163, %v165
    %v167 = vstv %s90
    %v168 = vadd.f32 %v166, %v167
    %v169 = vmul.f32 %v168, 0.5
    %v170 = vmul.f32 %v168, 0.70710677
    %v171 = verf.f32.pop %v170
    %v172 = vadd.f32 %v171, 1.0
    %v173 = vmul.f32 %v169, %v172
    %v174 = vstv %s77
    %v175 = vmul.f32 %v94, %v174
    %v176 = vstv %s78
    %v177 = vmul.f32 %v96, %v176
    %v178 = vadd.f32 %v175, %v177
    %v179 = vstv %s79
    %v180 = vmul.f32 %v98, %v179
    %v181 = vadd.f32 %v178, %v180
    %v182 = vstv %s91
    %v183 = vadd.f32 %v181, %v182
    %v184 = vmul.f32 %v183, 0.5
    %v185 = vmul.f32 %v183, 0.70710677
    %v186 = verf.f32.pop %v185
    %v187 = vadd.f32 %v186, 1.0
    %v188 = vmul.f32 %v184, %v187
    %v189 = vstv %s80
    %v190 = vmul.f32 %v94, %v189
    %v191 = vstv %s81
    %v192 = vmul.f32 %v96, %v191
    %v193 = vadd.f32 %v190, %v192
    %v194 = vstv %s82
    %v195 = vmul.f32 %v98, %v194
    %v196 = vadd.f32 %v193, %v195
    %v197 = vstv %s92
    %v198 = vadd.f32 %v196, %v197
    %v199 = vmul.f32 %v198, 0.5
    %v200 = vmul.f32 %v198, 0.70710677
    %v201 = verf.f32.pop %v200
    %v202 = vadd.f32 %v201, 1.0
    %v203 = vmul.f32 %v199, %v202
    %v204 = vstv %s83
    %v205 = vmul.f32 %v94, %v204
    %v206 = vstv %s84
    %v207 = vmul.f32 %v96, %v206
    %v208 = vadd.f32 %v205, %v207
    %v209 = vstv %s85
    %v210 = vmul.f32 %v98, %v209
    %v211 = vadd.f32 %v208, %v210
    %v212 = vstv %s93
    %v213 = vadd.f32 %v211, %v212
    %v214 = vmul.f32 %v213, 0.5
    %v215 = vmul.f32 %v213, 0.70710677
    %v216 = verf.f32.pop %v215
    %v217 = vadd.f32 %v216, 1.0
    %v218 = vmul.f32 %v214, %v217
    %v219 = vadd.f32 %v113, %v128
    %v220 = vadd.f32 %v143, %v158
    %v221 = vadd.f32 %v173, %v188
    %v222 = vadd.f32 %v203, %v218
    %v223 = vadd.f32 %v219, %v220
    %v224 = vadd.f32 %v221, %v222
    %v225 = vadd.f32 %v223, %v224
    %s226 = scalar_lea.vmem %s55, 6
    %v227 = vld [vmem:[%s226] sm:$0x3]
    %s228 = scalar_lea.vmem %s55, 8
    %v229 = vld [vmem:[%s228] sm:$0x3]
    %s230 = scalar_lea.vmem %s55, 10
    %v231 = vld [vmem:[%s230] sm:$0x3]
    %v232 = vmul.f32 %v227, %v99
    %v233 = vmul.f32 %v229, %v101
    %v234 = vadd.f32 %v232, %v233
    %v235 = vmul.f32 %v231, %v104
    %v236 = vadd.f32 %v234, %v235
    %v237 = vadd.f32 %v236, %v107
    %v238 = vmul.f32 %v237, 0.5
    %v239 = vmul.f32 %v237, 0.70710677
    %v240 = verf.f32.pop %v239
    %v241 = vadd.f32 %v240, 1.0
    %v242 = vmul.f32 %v238, %v241
    %v243 = vmul.f32 %v227, %v114
    %v244 = vmul.f32 %v229, %v116
    %v245 = vadd.f32 %v243, %v244
    %v246 = vmul.f32 %v231, %v119
    %v247 = vadd.f32 %v245, %v246
    %v248 = vadd.f32 %v247, %v122
    %v249 = vmul.f32 %v248, 0.5
    %v250 = vmul.f32 %v248, 0.70710677
    %v251 = verf.f32.pop %v250
    %v252 = vadd.f32 %v251, 1.0
    %v253 = vmul.f32 %v249, %v252
    %v254 = vmul.f32 %v227, %v129
    %v255 = vmul.f32 %v229, %v131
    %v256 = vadd.f32 %v254, %v255
    %v257 = vmul.f32 %v231, %v134
    %v258 = vadd.f32 %v256, %v257
    %v259 = vadd.f32 %v258, %v137
    %v260 = vmul.f32 %v259, 0.5
    %v261 = vmul.f32 %v259, 0.70710677
    %v262 = verf.f32.pop %v261
    %v263 = vadd.f32 %v262, 1.0
    %v264 = vmul.f32 %v260, %v263
    %v265 = vmul.f32 %v227, %v144
    %v266 = vmul.f32 %v229, %v146
    %v267 = vadd.f32 %v265, %v266
    %v268 = vmul.f32 %v231, %v149
    %v269 = vadd.f32 %v267, %v268
    %v270 = vadd.f32 %v269, %v152
    %v271 = vmul.f32 %v270, 0.5
    %v272 = vmul.f32 %v270, 0.70710677
    %v273 = verf.f32.pop %v272
    %v274 = vadd.f32 %v273, 1.0
    %v275 = vmul.f32 %v271, %v274
    %v276 = vmul.f32 %v227, %v159
    %v277 = vmul.f32 %v229, %v161
    %v278 = vadd.f32 %v276, %v277
    %v279 = vmul.f32 %v231, %v164
    %v280 = vadd.f32 %v278, %v279
    %v281 = vadd.f32 %v280, %v167
    %v282 = vmul.f32 %v281, 0.5
    %v283 = vmul.f32 %v281, 0.70710677
    %v284 = verf.f32.pop %v283
    %v285 = vadd.f32 %v284, 1.0
    %v286 = vmul.f32 %v282, %v285
    %v287 = vmul.f32 %v227, %v174
    %v288 = vmul.f32 %v229, %v176
    %v289 = vadd.f32 %v287, %v288
    %v290 = vmul.f32 %v231, %v179
    %v291 = vadd.f32 %v289, %v290
    %v292 = vadd.f32 %v291, %v182
    %v293 = vmul.f32 %v292, 0.5
    %v294 = vmul.f32 %v292, 0.70710677
    %v295 = verf.f32.pop %v294
    %v296 = vadd.f32 %v295, 1.0
    %v297 = vmul.f32 %v293, %v296
    %v298 = vmul.f32 %v227, %v189
    %v299 = vmul.f32 %v229, %v191
    %v300 = vadd.f32 %v298, %v299
    %v301 = vmul.f32 %v231, %v194
    %v302 = vadd.f32 %v300, %v301
    %v303 = vadd.f32 %v302, %v197
    %v304 = vmul.f32 %v303, 0.5
    %v305 = vmul.f32 %v303, 0.70710677
    %v306 = verf.f32.pop %v305
    %v307 = vadd.f32 %v306, 1.0
    %v308 = vmul.f32 %v304, %v307
    %v309 = vmul.f32 %v227, %v204
    %v310 = vmul.f32 %v229, %v206
    %v311 = vadd.f32 %v309, %v310
    %v312 = vmul.f32 %v231, %v209
    %v313 = vadd.f32 %v311, %v312
    %v314 = vadd.f32 %v313, %v212
    %v315 = vmul.f32 %v314, 0.5
    %v316 = vmul.f32 %v314, 0.70710677
    %v317 = verf.f32.pop %v316
    %v318 = vadd.f32 %v317, 1.0
    %v319 = vmul.f32 %v315, %v318
    %v320 = vadd.f32 %v242, %v253
    %v321 = vadd.f32 %v264, %v275
    %v322 = vadd.f32 %v286, %v297
    %v323 = vadd.f32 %v308, %v319
    %v324 = vadd.f32 %v320, %v321
    %v325 = vadd.f32 %v322, %v323
    %v326 = vadd.f32 %v324, %v325
    %v327 = vadd.f32 %v225, %v326
    %v328 = vadd.f32 %v327, 0.0
    %v329 = vld [vmem:[#allocation2] sm:$0x3]
    %v330 = vadd.f32 %v329, %v328
    %331 = vst [vmem:[#allocation2] sm:$0x3] %v330
    // Predicated region
    $region26: #{tpu_custom_call.1} parent=1 // pred_check
      %p332 = pneg %p57
    $region27: #{tpu_custom_call.1} parent=1 // pred_check_branch
      %334 = sbr.rel (%p332) target = $region29
    $region28: #{tpu_custom_call.1} parent=1 // pred_region
      %v335 = vld [vmem:[#allocation2] sm:$0x3]
      %vm336 = vcmask 1041408
      %v337 = vsel %vm336, %v335, 0.0
      %338 = vadd.xlane.f32.xlu0 %v337
      %v339 = vpop.xlane.xlu0 %338
      %v340 = vrot.slane %v339, 4
      %v341 = vadd.f32 %v339, %v340
      %v342 = vrot.slane %v341, 2
      %v343 = vadd.f32 %v341, %v342
      %v344 = vrot.slane %v343, 1
      %v345 = vadd.f32 %v343, %v344
      %s346 = vtos %v345
      %s347 = scalar_lea.smem [#allocation8], 0
      %348 = sst [smem:[%s347]] %s346
    $region29: #{tpu_custom_call.1} parent=1 // pred_fallthru
      _
    // Predicated region
    $region30: #{tpu_custom_call.1} parent=1 // pred_check
      _
    $region31: #{tpu_custom_call.1} parent=1 // pred_check_branch
      %350 = sbr.rel (0) target = $region33
    $region32: #{tpu_custom_call.1} parent=1 // pred_region
      %s352 = ssub.s32 16, 16
      %353 = vsyncadd [#allocation4], %s352
      %356 = dma.smem_to_hbm [#allocation8], 16, %s3, [#allocation4]
    $region33: #{tpu_custom_call.1} parent=1 // pred_fallthru
      _
    // Predicated region
    $region34: #{tpu_custom_call.1} parent=1 // pred_check
      _
    $region35: #{tpu_custom_call.1} parent=1 // pred_check_branch
      %358 = sbr.rel (0) target = $region37
    $region36: #{tpu_custom_call.1} parent=1 // pred_region
      %359 = dma.done [#allocation4], 16
    $region37: #{tpu_custom_call.1} parent=1 // pred_fallthru
      _
    %360 = sfence
    %361 = vsyncpa [#allocation4], 1
    %362 = vsyncpa [#allocation5], 1
    %363 = vsyncpa [#allocation7], 1

</llo_original>
